<compile_context>
chip_gen: v5e
topology: v5e:2x2
jax: 0.10.0
libtpu: 0.0.40
codegen_flags: <defaults>
</compile_context>

<pallas_src>
import functools

import jax
import jax.numpy as jnp
import numpy as np
from jax.experimental import pallas as pl
from jax.experimental.pallas import tpu as pltpu

# ---------------- config (small, consistent with the module defaults) ----------------
BATCH = 8
HIDDEN = 128          # factor_dim (must be > num_factor_per_cluster)
NUM_FACTOR = 64       # num_factor_per_cluster
NUM_CLUSTERS = 4      # args.num_unsup_clusters
NUM_LABELS = 2        # args.num_sup_labels
UNSUP_WEIGHTS = {"c": 1.0, "se": 1.0, "tri": 1.0}   # args.unsup_losses_weights = "1.0|1.0|1.0"


# ======================= fused KFactor + triplet + weighting kernel =======================
def _fused_unsup_kernel(x_ref, pcat_ref, mcat_ref, loss_ref, label_ref,
                        *, n_clusters, w_c, w_se, w_tri):
    """Single gridless invocation.

    x_ref    : (3B, H)    stacked [anchor; pos; neg] embeddings
    pcat_ref : (H, N*K)   columns n*K:(n+1)*K = P_n = D_n (D_n^T D_n)^{-T}
    mcat_ref : (H, N*H)   columns n*H:(n+1)*H = M_n = P_n D_n^T
    outputs  : loss (1,1) f32 weighted total, label (B,1) int32 (anchor only)
    """
    x = x_ref[...]                                    # (3B, H) f32
    b3, f = x.shape
    b = b3 // 3
    k = pcat_ref.shape[1] // n_clusters

    # Two wide MXU contractions give Cs and x_hat for every cluster at once.
    cs_all = jnp.dot(x, pcat_ref[...], preferred_element_type=jnp.float32)    # (3B, N*K)
    xhat_all = jnp.dot(x, mcat_ref[...], preferred_element_type=jnp.float32)  # (3B, N*H)

    # Per-cluster squared residual and ||C||^2 (small VPU/XLU reductions).
    dist_cols = []
    csq_cols = []
    for ci in range(n_clusters):
        diff = xhat_all[:, ci * f:(ci + 1) * f] - x
        dist_cols.append(jnp.sum(diff * diff, axis=-1, keepdims=True))        # (3B, 1)
        coef = cs_all[:, ci * k:(ci + 1) * k]
        csq_cols.append(jnp.sum(coef * coef, axis=-1, keepdims=True))         # (3B, 1)

    # Running argmin (first-minimum tie-breaking, matches torch.argmin) with the
    # selected ||C||^2 carried along -> no gather needed.
    min_dist = dist_cols[0]
    c_sel = csq_cols[0]
    label = jnp.zeros((b3, 1), jnp.int32)
    for ci in range(1, n_clusters):
        better = dist_cols[ci] < min_dist
        min_dist = jnp.where(better, dist_cols[ci], min_dist)
        c_sel = jnp.where(better, csq_cols[ci], c_sel)
        label = jnp.where(better, ci, label)

    se_loss = jnp.sum(min_dist, keepdims=True)        # (1,1)
    c_loss = jnp.sum(c_sel, keepdims=True)            # (1,1)

    # Triplet margin loss (margin=1.0, p=2, eps=1e-6, mean reduction; matches
    # torch.nn.functional.triplet_margin_loss defaults).
    a = x[0:b, :]
    p = x[b:2 * b, :]
    ng = x[2 * b:3 * b, :]
    eps = 1e-6
    d_ap = jnp.sqrt(jnp.sum(jnp.square(a - p + eps), axis=-1, keepdims=True))  # (B,1)
    d_an = jnp.sqrt(jnp.sum(jnp.square(a - ng + eps), axis=-1, keepdims=True))
    per = jnp.maximum(d_ap - d_an + 1.0, 0.0)
    tri_loss = jnp.sum(per, keepdims=True) * (1.0 / b)                         # (1,1)

    loss_ref[...] = w_c * c_loss + w_se * se_loss + w_tri * tri_loss
    label_ref[...] = label[0:b, :]                    # anchor labels only


def _precompute_projections(D):
    """D-only precompute (done once per D, not per embedding)."""
    N, F, K = D.shape
    dtd = jnp.einsum("nij,nik->njk", D, D)          # (N, K, K) = D_n^T D_n
    # TODO(synk): torch.inverse has no Pallas equivalent; the (K,K) batched inverse
    # is XLA glue (everything per-sample runs in the fused kernel).
    dinv = jnp.linalg.inv(dtd)                      # (N, K, K)
    P = jnp.einsum("nij,nkj->nik", D, dinv)         # D_n @ dinv_n^T    (N, F, K)
    M = jnp.einsum("nik,njk->nij", P, D)            # P_n @ D_n^T       (N, F, F)
    p_cat = jnp.transpose(P, (1, 0, 2)).reshape(F, N * K)   # (F, N*K) lane-dense
    m_cat = jnp.transpose(M, (1, 0, 2)).reshape(F, N * F)   # (F, N*F) lane-dense
    return p_cat, m_cat


def get_unsup_loss(embs, D, weights=UNSUP_WEIGHTS):
    """Pallas implementation of TdscLanguageModel.get_unsup_loss."""
    x_all = jnp.concatenate([embs["anchor"], embs["pos"], embs["neg"]], axis=0)  # (3B, H)
    p_cat, m_cat = _precompute_projections(D)
    b3 = x_all.shape[0]
    b = b3 // 3
    n_clusters = D.shape[0]

    kernel = functools.partial(
        _fused_unsup_kernel,
        n_clusters=n_clusters,
        w_c=float(weights["c"]),
        w_se=float(weights["se"]),
        w_tri=float(weights["tri"]),
    )

    total_loss, label = pl.pallas_call(
        kernel,
        out_shape=(
            jax.ShapeDtypeStruct((1, 1), jnp.float32),
            jax.ShapeDtypeStruct((b, 1), jnp.int32),
        ),
    )(x_all, p_cat, m_cat)

    return total_loss[0, 0], label[:, 0]


# ======================= LMClassificationHead kernel =======================
def _cls_head_kernel(x_ref, w1_ref, b1_ref, w2_ref, b2_ref, o_ref):
    # TODO(synk): nn.Dropout treated as identity (inference / eval mode).
    h = jnp.tanh(jnp.dot(x_ref[...], w1_ref[...], preferred_element_type=jnp.float32)
                 + b1_ref[...])
    o_ref[...] = jnp.dot(h, w2_ref[...], preferred_element_type=jnp.float32) + b2_ref[...]


def classification_head(x, w1, b1, w2, b2):
    B, H = x.shape
    L = w2.shape[1]
    Lp = ((L + 127) // 128) * 128                    # lane-dense (unmasked) output width
    w2_pad = jnp.zeros((H, Lp), jnp.float32).at[:, :L].set(w2)
    b2_pad = jnp.zeros((Lp,), jnp.float32).at[:L].set(b2)
    out = pl.pallas_call(
        _cls_head_kernel,
        out_shape=jax.ShapeDtypeStruct((B, Lp), jnp.float32),
    )(x, w1, b1.reshape(1, H), w2_pad, b2_pad.reshape(1, Lp))
    return out[:, :L]


# ======================= main =======================
if __name__ == "__main__":
    key = jax.random.PRNGKey(0)
    k_d, k_w1, k_b1, k_w2, k_b2, k_a, k_p, k_n = jax.random.split(key, 8)

    # deterministic parameters (shapes from the module's __init__)
    D = jax.random.normal(k_d, (NUM_CLUSTERS, HIDDEN, NUM_FACTOR), jnp.float32)
    w1 = jax.random.normal(k_w1, (HIDDEN, HIDDEN), jnp.float32) * 0.02
    b1 = jax.random.normal(k_b1, (HIDDEN,), jnp.float32) * 0.02
    w2 = jax.random.normal(k_w2, (HIDDEN, NUM_LABELS), jnp.float32) * 0.02
    b2 = jax.random.normal(k_b2, (NUM_LABELS,), jnp.float32) * 0.02

    # TODO(synk): the HuggingFace stem LM (AutoModel / get_lm_embedding) has no Pallas
    # equivalent; sentence representations are synthesized deterministically instead.
    embs = {
        "anchor": jax.random.normal(k_a, (BATCH, HIDDEN), jnp.float32),
        "pos": jax.random.normal(k_p, (BATCH, HIDDEN), jnp.float32),
        "neg": jax.random.normal(k_n, (BATCH, HIDDEN), jnp.float32),
    }

    cls_fn = jax.jit(classification_head)
    unsup_fn = jax.jit(lambda anc, pos, neg, d: get_unsup_loss(
        {"anchor": anc, "pos": pos, "neg": neg}, d))

    logits = cls_fn(embs["anchor"], w1, b1, w2, b2)
    total_loss, cluster_label = unsup_fn(embs["anchor"], embs["pos"], embs["neg"], D)
    jax.block_until_ready((logits, total_loss, cluster_label))

    # ---------------- pure-JAX reference (mirrors the PyTorch forward) ----------------
    def ref_kfactor(x, d):
        dtd = jnp.einsum("nij,nik->njk", d, d)
        dinv = jnp.linalg.inv(dtd)
        dtx = jnp.einsum("nij,bi->nbj", d, x)
        cs = jnp.einsum("nbj,nkj->nbk", dtx, dinv)
        xhat = jnp.einsum("nij,nbj->nbi", d, cs)
        dist = jnp.sum(jnp.square(xhat - x[None]), axis=-1)   # (N, B)
        label = jnp.argmin(dist, axis=0)
        bidx = jnp.arange(x.shape[0])
        se = jnp.sum(dist[label, bidx])
        c = jnp.sum(jnp.sum(jnp.square(cs), axis=-1)[label, bidx])
        return c, se, label, dist

    ref_c, ref_se = 0.0, 0.0
    ref_label, ref_dist_anchor = None, None
    for s in ("anchor", "pos", "neg"):
        c, se, lab, dist = ref_kfactor(embs[s], D)
        ref_c = ref_c + c
        ref_se = ref_se + se
        if s == "anchor":
            ref_label, ref_dist_anchor = lab, dist
    eps = 1e-6
    d_ap = jnp.sqrt(jnp.sum(jnp.square(embs["anchor"] - embs["pos"] + eps), axis=-1))
    d_an = jnp.sqrt(jnp.sum(jnp.square(embs["anchor"] - embs["neg"] + eps), axis=-1))
    ref_tri = jnp.mean(jnp.maximum(d_ap - d_an + 1.0, 0.0))
    ref_total = (UNSUP_WEIGHTS["c"] * ref_c + UNSUP_WEIGHTS["se"] * ref_se
                 + UNSUP_WEIGHTS["tri"] * ref_tri)
    ref_logits = jnp.tanh(embs["anchor"] @ w1 + b1) @ w2 + b2

    np.testing.assert_allclose(np.asarray(total_loss), np.asarray(ref_total),
                               rtol=5e-2, atol=1e-2)
    np.testing.assert_allclose(np.asarray(logits), np.asarray(ref_logits),
                               rtol=5e-2, atol=1e-2)

    # Cluster labels must match the reference argmin, allowing a flip only when the
    # two residuals are within matmul-precision noise of each other.
    kl = np.asarray(cluster_label)
    rl = np.asarray(ref_label)
    rd = np.asarray(ref_dist_anchor)
    bidx = np.arange(BATCH)
    gap = np.abs(rd[kl, bidx] - rd[rl, bidx])
    assert np.all((kl == rl) | (gap <= 5e-2 * np.abs(rd[rl, bidx]) + 1e-2)), \
        "cluster label mismatch beyond numerical tolerance"

    print("KERNEL_OK")
</pallas_src>

<mosaic_0001>
module attributes {stable_mosaic.version = 11 : i64} {
  func.func @_cls_head_kernel(%arg0: memref<8x128xf32, #tpu.memory_space<vmem>>, %arg1: memref<128x128xf32, #tpu.memory_space<vmem>>, %arg2: memref<1x128xf32, #tpu.memory_space<vmem>>, %arg3: memref<128x128xf32, #tpu.memory_space<vmem>>, %arg4: memref<1x128xf32, #tpu.memory_space<vmem>>, %arg5: memref<8x128xf32, #tpu.memory_space<vmem>>) attributes {dimension_semantics = [], scalar_prefetch = 0 : i64, scratch_operands = 0 : i64, tpu.core_type = #tpu.core_type<tc>} {
    %c0 = arith.constant 0 : index
    %c0_0 = arith.constant 0 : index
    %0 = vector.load %arg0[%c0, %c0_0] : memref<8x128xf32, #tpu.memory_space<vmem>>, vector<8x128xf32>
    %c0_1 = arith.constant 0 : index
    %c0_2 = arith.constant 0 : index
    %1 = vector.load %arg1[%c0_1, %c0_2] : memref<128x128xf32, #tpu.memory_space<vmem>>, vector<128x128xf32>
    %cst = arith.constant dense<0.000000e+00> : vector<8x128xf32>
    %2 = tpu.matmul %0, %1, %cst {dimension_numbers = #tpu.dot_dimension_numbers<[1], [0], [0], [1], [0, 0, 1, 1], [], []>} : vector<8x128xf32>, vector<128x128xf32>, vector<8x128xf32> -> vector<8x128xf32>
    %c0_3 = arith.constant 0 : index
    %c0_4 = arith.constant 0 : index
    %3 = vector.load %arg2[%c0_3, %c0_4] : memref<1x128xf32, #tpu.memory_space<vmem>>, vector<1x128xf32>
    %4 = vector.broadcast %3 : vector<1x128xf32> to vector<8x128xf32>
    %5 = arith.addf %2, %4 : vector<8x128xf32>
    %6 = math.tanh %5 : vector<8x128xf32>
    %c0_5 = arith.constant 0 : index
    %c0_6 = arith.constant 0 : index
    %7 = vector.load %arg3[%c0_5, %c0_6] : memref<128x128xf32, #tpu.memory_space<vmem>>, vector<128x128xf32>
    %cst_7 = arith.constant dense<0.000000e+00> : vector<8x128xf32>
    %8 = tpu.matmul %6, %7, %cst_7 {dimension_numbers = #tpu.dot_dimension_numbers<[1], [0], [0], [1], [0, 0, 1, 1], [], []>} : vector<8x128xf32>, vector<128x128xf32>, vector<8x128xf32> -> vector<8x128xf32>
    %c0_8 = arith.constant 0 : index
    %c0_9 = arith.constant 0 : index
    %9 = vector.load %arg4[%c0_8, %c0_9] : memref<1x128xf32, #tpu.memory_space<vmem>>, vector<1x128xf32>
    %10 = vector.broadcast %9 : vector<1x128xf32> to vector<8x128xf32>
    %11 = arith.addf %8, %10 : vector<8x128xf32>
    %c0_10 = arith.constant 0 : index
    %c0_11 = arith.constant 0 : index
    %12 = vector.load %arg5[%c0_10, %c0_11] : memref<8x128xf32, #tpu.memory_space<vmem>>, vector<8x128xf32>
    tpu.vector_store %arg5[%c0_10, %c0_11], %11 {strides = array<i32>} : memref<8x128xf32, #tpu.memory_space<vmem>>, vector<8x128xf32>,
    return
  }
}

</mosaic_0001>

<llo_original>
// kernel: classification_head.1
$region0: #{classification_head.1}
  #allocation0 [shape = 'u32[]', space=smem, size = 0x4, offset = 0x4, fixed_abs, tag = 'smem constant byte address 0x4 - core index']
  #allocation1 [shape = 'u32[72,128]{1,0:T(1,128)}', space=vmem, size = 0x9000, scoped, tag = 'internal scratch']
  %s0 = inlined_call_operand.vmem [shape: f32[8,128], index: 0, kind: input, shape index: {}]
  %s1 = inlined_call_operand.vmem [shape: f32[128,128], index: 1, kind: input, shape index: {}]
  %s2 = inlined_call_operand.vmem [shape: f32[1,128], index: 2, kind: input, shape index: {}]
  %s3 = inlined_call_operand.vmem [shape: f32[128,128], index: 3, kind: input, shape index: {}]
  %s4 = inlined_call_operand.vmem [shape: f32[1,128], index: 4, kind: input, shape index: {}]
  %s5 = inlined_call_operand.vmem [shape: f32[8,128], index: 5, kind: output, shape index: {}]
  %s6 = sld [smem:[#allocation0]]
  $region30: #{classification_head.1} parent=0
    _
  %s8 = ssub.s32 1, %s6
  %s9 = scalar_select 0, %s8, %s6
  // Predicated region
  $region2: #{classification_head.1} parent=0 // pred_check
    _
  $region3: #{classification_head.1} parent=0 // pred_check_branch
    %11 = sbr.rel (0) target = $region5
  $region4: #{classification_head.1} parent=0 // pred_region
    _
  $region5: #{classification_head.1} parent=0 // pred_fallthru
    _
  // Predicated region
  $region6: #{classification_head.1} parent=0 // pred_check
    _
  $region7: #{classification_head.1} parent=0 // pred_check_branch
    %13 = sbr.rel (0) target = $region9
  $region8: #{classification_head.1} parent=0 // pred_region
    _
  $region9: #{classification_head.1} parent=0 // pred_fallthru
    _
  // Predicated region
  $region10: #{classification_head.1} parent=0 // pred_check
    _
  $region11: #{classification_head.1} parent=0 // pred_check_branch
    %15 = sbr.rel (0) target = $region13
  $region12: #{classification_head.1} parent=0 // pred_region
    _
  $region13: #{classification_head.1} parent=0 // pred_fallthru
    _
  // Predicated region
  $region14: #{classification_head.1} parent=0 // pred_check
    _
  $region15: #{classification_head.1} parent=0 // pred_check_branch
    %17 = sbr.rel (0) target = $region17
  $region16: #{classification_head.1} parent=0 // pred_region
    _
  $region17: #{classification_head.1} parent=0 // pred_fallthru
    _
  // Predicated region
  $region18: #{classification_head.1} parent=0 // pred_check
    _
  $region19: #{classification_head.1} parent=0 // pred_check_branch
    %19 = sbr.rel (0) target = $region21
  $region20: #{classification_head.1} parent=0 // pred_region
    _
  $region21: #{classification_head.1} parent=0 // pred_fallthru
    _
  %v20 = vld [vmem:[%s0] sm:$0xff]
  %v21 = vld [vmem:[%s1] sm:$0xff]
  %v22 = vld [vmem:[%s1 + $0x8] sm:$0xff]
  %v23 = vld [vmem:[%s1 + $0x10] sm:$0xff]
  %v24 = vld [vmem:[%s1 + $0x18] sm:$0xff]
  %v25 = vld [vmem:[%s1 + $0x20] sm:$0xff]
  %v26 = vld [vmem:[%s1 + $0x28] sm:$0xff]
  %v27 = vld [vmem:[%s1 + $0x30] sm:$0xff]
  %v28 = vld [vmem:[%s1 + $0x38] sm:$0xff]
  %v29 = vld [vmem:[%s1 + $0x40] sm:$0xff]
  %v30 = vld [vmem:[%s1 + $0x48] sm:$0xff]
  %v31 = vld [vmem:[%s1 + $0x50] sm:$0xff]
  %v32 = vld [vmem:[%s1 + $0x58] sm:$0xff]
  %v33 = vld [vmem:[%s1 + $0x60] sm:$0xff]
  %v34 = vld [vmem:[%s1 + $0x68] sm:$0xff]
  %v35 = vld [vmem:[%s1 + $0x70] sm:$0xff]
  %v36 = vld [vmem:[%s1 + $0x78] sm:$0xff]
  %v37 = vld [vmem:[%s2] sm:$0x1]
  %v39 = vperm.slane %v37, 0
  %41 = vmatpush.msra.mxu0 %v36
  %42 = vmatpush.msra.mxu0 %v35
  %43 = vmatpush.msra.mxu0 %v34
  %44 = vmatpush.msra.mxu0 %v33
  %45 = vmatpush.msra.mxu0 %v32
  %46 = vmatpush.msra.mxu0 %v31
  %47 = vmatpush.msra.mxu0 %v30
  %48 = vmatpush.msra.mxu0 %v29
  %49 = vmatpush.msra.mxu0 %v28
  %50 = vmatpush.msra.mxu0 %v27
  %51 = vmatpush.msra.mxu0 %v26
  %52 = vmatpush.msra.mxu0 %v25
  %53 = vmatpush.msra.mxu0 %v24
  %54 = vmatpush.msra.mxu0 %v23
  %55 = vmatpush.msra.mxu0 %v22
  %56 = vmatpush.msra.mxu0 %v21
  %57 = vmatmul.f32.gmra.mxu0 %v20
  %v58 = vpop.f32.mrf.mxu0
  %v59 = vadd.f32 %v39, %v58
  %60 = vdwg.mxu0
  %v61 = vtanh.pop %v59
  %v62 = vld [vmem:[%s3] sm:$0xff]
  %v63 = vld [vmem:[%s3 + $0x8] sm:$0xff]
  %v64 = vld [vmem:[%s3 + $0x10] sm:$0xff]
  %v65 = vld [vmem:[%s3 + $0x18] sm:$0xff]
  %v66 = vld [vmem:[%s3 + $0x20] sm:$0xff]
  %v67 = vld [vmem:[%s3 + $0x28] sm:$0xff]
  %v68 = vld [vmem:[%s3 + $0x30] sm:$0xff]
  %v69 = vld [vmem:[%s3 + $0x38] sm:$0xff]
  %v70 = vld [vmem:[%s3 + $0x40] sm:$0xff]
  %v71 = vld [vmem:[%s3 + $0x48] sm:$0xff]
  %v72 = vld [vmem:[%s3 + $0x50] sm:$0xff]
  %v73 = vld [vmem:[%s3 + $0x58] sm:$0xff]
  %v74 = vld [vmem:[%s3 + $0x60] sm:$0xff]
  %v75 = vld [vmem:[%s3 + $0x68] sm:$0xff]
  %v76 = vld [vmem:[%s3 + $0x70] sm:$0xff]
  %v77 = vld [vmem:[%s3 + $0x78] sm:$0xff]
  %v78 = vld [vmem:[%s4] sm:$0x1]
  %v80 = vperm.slane %v78, 0
  %82 = vmatpush.msra.mxu0 %v77
  %83 = vmatpush.msra.mxu0 %v76
  %84 = vmatpush.msra.mxu0 %v75
  %85 = vmatpush.msra.mxu0 %v74
  %86 = vmatpush.msra.mxu0 %v73
  %87 = vmatpush.msra.mxu0 %v72
  %88 = vmatpush.msra.mxu0 %v71
  %89 = vmatpush.msra.mxu0 %v70
  %90 = vmatpush.msra.mxu0 %v69
  %91 = vmatpush.msra.mxu0 %v68
  %92 = vmatpush.msra.mxu0 %v67
  %93 = vmatpush.msra.mxu0 %v66
  %94 = vmatpush.msra.mxu0 %v65
  %95 = vmatpush.msra.mxu0 %v64
  %96 = vmatpush.msra.mxu0 %v63
  %97 = vmatpush.msra.mxu0 %v62
  %98 = vmatmul.f32.gmra.mxu0 %v61
  %v99 = vpop.f32.mrf.mxu0
  %v100 = vadd.f32 %v80, %v99
  %101 = vdwg.mxu0
  %102 = vst [vmem:[%s5] sm:$0xff] %v100
  // Predicated region
  $region22: #{classification_head.1} parent=0 // pred_check
    _
  $region23: #{classification_head.1} parent=0 // pred_check_branch
    %104 = sbr.rel (0) target = $region25
  $region24: #{classification_head.1} parent=0 // pred_region
    _
  $region25: #{classification_head.1} parent=0 // pred_fallthru
    _
  // Predicated region
  $region26: #{classification_head.1} parent=0 // pred_check
    _
  $region27: #{classification_head.1} parent=0 // pred_check_branch
    %106 = sbr.rel (0) target = $region29
  $region28: #{classification_head.1} parent=0 // pred_region
    _
  $region29: #{classification_head.1} parent=0 // pred_fallthru
    _

</llo_original>
